<compile_context>
chip_gen: v7x
topology: tpu7x:2x2x1
jax: 0.10.0
libtpu: 0.0.40
codegen_flags: <defaults>
</compile_context>

<pallas_src>
import functools

import jax
import jax.numpy as jnp
from jax.experimental import pallas as pl
from jax.experimental.pallas import tpu as pltpu


def _round_up(x, m):
    return ((x + m - 1) // m) * m


def _ce_kernel(preds_ref, targets_ref, out_ref, m_sc, l_sc, t_sc, *,
               n_total, c_total, ragged_c):
    # preds_ref:   (TN, TC) logits tile (kept in input dtype; widened only for exp)
    # targets_ref: (TN, 1)  int32 class indices for this row tile
    # out_ref:     (TN, 1)  f32 per-row loss (padded rows written as 0)
    # m_sc/l_sc/t_sc: (TN,1) f32 scratch: running max / sum-exp / target logit
    ri = pl.program_id(0)                  # row-tile index  ("parallel")
    ci = pl.program_id(1)                  # class-tile index ("arbitrary", innermost)
    tn, tc = preds_ref.shape
    last_ci = pl.num_programs(1) - 1

    @pl.when(ci == 0)
    def _init():
        m_sc[...] = jnp.full_like(m_sc, -jnp.inf)
        l_sc[...] = jnp.zeros_like(l_sc)
        t_sc[...] = jnp.zeros_like(t_sc)

    def _update(mask_pad):
        logits_in = preds_ref[...]                                   # native dtype
        local_col = jax.lax.broadcasted_iota(jnp.int32, (tn, tc), 1)

        if mask_pad:
            # Only the last, ragged class tile pays for this mask.
            n_valid = c_total - ci * tc                               # scalar
            neg_inf = jnp.asarray(-jnp.inf, dtype=logits_in.dtype)
            logits_in = jnp.where(local_col < n_valid, logits_in, neg_inf)

        # Target-logit contribution from this class tile. Tile-local compare:
        # subtract ci*tc from the (TN,1) targets instead of adding it to the
        # full (TN,TC) iota. At most one nonzero per row -> bf16 sum is exact.
        tgt_local = targets_ref[...] - ci * tc                        # (TN, 1)
        hit = local_col == tgt_local
        zero = jnp.asarray(0, dtype=logits_in.dtype)
        t_hit = jnp.sum(jnp.where(hit, logits_in, zero),
                        axis=-1, keepdims=True).astype(jnp.float32)
        t_sc[...] = t_sc[...] + t_hit

        # Online logsumexp: row max in input dtype (exact), exp/accumulate in f32.
        bmax = jnp.max(logits_in, axis=-1, keepdims=True).astype(jnp.float32)
        m_new = jnp.maximum(m_sc[...], bmax)
        p = jnp.exp(logits_in.astype(jnp.float32) - m_new)
        l_sc[...] = (l_sc[...] * jnp.exp(m_sc[...] - m_new)
                     + jnp.sum(p, axis=-1, keepdims=True))
        m_sc[...] = m_new

    if ragged_c:
        @pl.when(ci != last_ci)
        def _unmasked():
            _update(mask_pad=False)

        @pl.when(ci == last_ci)
        def _masked():
            _update(mask_pad=True)
    else:
        _update(mask_pad=False)

    @pl.when(ci == last_ci)
    def _finalize():
        row = jax.lax.broadcasted_iota(jnp.int32, (tn, 1), 0) + ri * tn
        row_valid = row < n_total
        per_row = m_sc[...] + jnp.log(l_sc[...]) - t_sc[...]
        out_ref[...] = jnp.where(row_valid, per_row, 0.0)


def _vmem_budgets(logits_tile_budget_bytes, vmem_limit_bytes):
    """Generation-aware defaults: big tiles on 128-MiB-VMEM gens, safe on v7x."""
    if logits_tile_budget_bytes is not None and vmem_limit_bytes is not None:
        return logits_tile_budget_bytes, vmem_limit_bytes
    cap = None
    try:
        cap = pltpu.get_tpu_info().vmem_capacity_bytes
    except Exception:
        cap = None
    if cap is not None and cap >= 96 * 1024 * 1024:
        # v5e / v6e: 128 MiB physical VMEM.
        tile_b, lim_b = 56 * 1024 * 1024, 96 * 1024 * 1024
    else:
        # v7x (64 MiB per TensorCore) or unknown: stay conservative.
        tile_b, lim_b = 24 * 1024 * 1024, 48 * 1024 * 1024
    if logits_tile_budget_bytes is None:
        logits_tile_budget_bytes = tile_b
    if vmem_limit_bytes is None:
        vmem_limit_bytes = lim_b
    return logits_tile_budget_bytes, vmem_limit_bytes


def cross_entropy_loss(preds, targets, *, row_tile=None, class_tile=None,
                       max_row_tile=512,
                       logits_tile_budget_bytes=None,
                       vmem_limit_bytes=None):
    """preds: (N, C) float logits; targets: (N,) int class indices -> scalar f32 mean loss."""
    n, c = preds.shape
    itemsize = jnp.dtype(preds.dtype).itemsize
    logits_tile_budget_bytes, vmem_limit_bytes = _vmem_budgets(
        logits_tile_budget_bytes, vmem_limit_bytes)

    # Row tile: multiple of 8 sublanes (16 when logits are sub-32-bit, e.g. bf16).
    # Aim for >= 2 row tiles when N allows it so the "parallel" axis actually
    # shards across both TensorCores on v7x (costs only one extra grid step on
    # single-TC gens).
    row_align = 8 if itemsize >= 4 else 16
    if row_tile is None:
        if n > row_align:
            tn = min(max_row_tile, _round_up((n + 1) // 2, row_align))
        else:
            tn = _round_up(n, row_align)
    else:
        tn = _round_up(row_tile, row_align)

    # Class tile: take the whole class axis if the double-buffered logits tile
    # fits the VMEM budget; otherwise stream 128-lane-aligned chunks with the
    # online logsumexp above.
    if class_tile is not None:
        tc = class_tile
    elif 2 * tn * c * itemsize <= logits_tile_budget_bytes:
        tc = c
    else:
        tc = (logits_tile_budget_bytes // (2 * tn * itemsize)) // 128 * 128
        tc = max(128, tc)
        tc = min(tc, _round_up(c, 128))
        if tc >= c:
            tc = c

    num_row_tiles = pl.cdiv(n, tn)
    num_class_tiles = pl.cdiv(c, tc)
    n_padded = num_row_tiles * tn
    ragged_c = (c % tc) != 0

    targets2d = targets.astype(jnp.int32).reshape(n, 1)
    kernel = functools.partial(_ce_kernel, n_total=n, c_total=c,
                               ragged_c=ragged_c)

    per_row_losses = pl.pallas_call(
        kernel,
        out_shape=jax.ShapeDtypeStruct((n_padded, 1), jnp.float32),
        grid_spec=pltpu.PrefetchScalarGridSpec(
            num_scalar_prefetch=0,
            grid=(num_row_tiles, num_class_tiles),
            in_specs=[
                pl.BlockSpec((tn, tc), lambda ri, ci: (ri, ci)),   # logits tile
                pl.BlockSpec((tn, 1), lambda ri, ci: (ri, 0)),     # targets tile
            ],
            out_specs=pl.BlockSpec((tn, 1), lambda ri, ci: (ri, 0)),
            scratch_shapes=[
                pltpu.VMEM((tn, 1), jnp.float32),   # running max
                pltpu.VMEM((tn, 1), jnp.float32),   # running sum-exp
                pltpu.VMEM((tn, 1), jnp.float32),   # running target logit
            ],
        ),
        compiler_params=pltpu.CompilerParams(
            dimension_semantics=("parallel", "arbitrary"),
            vmem_limit_bytes=vmem_limit_bytes,
        ),
    )(preds, targets2d)

    # Tiny final reduction in XLA; padded rows contribute exactly 0.
    return jnp.sum(per_row_losses) / jnp.float32(n)


def _reference(preds, targets):
    logits = preds.astype(jnp.float32)
    lse = jax.scipy.special.logsumexp(logits, axis=-1)
    tgt = jnp.take_along_axis(logits, targets[:, None].astype(jnp.int32),
                              axis=-1)[:, 0]
    return jnp.mean(lse - tgt)


if __name__ == "__main__":
    key = jax.random.PRNGKey(0)

    # Case 1: small, single-tile path (matches the module's simple forward).
    k1, k2 = jax.random.split(key)
    N, C = 8, 32
    preds = jax.random.normal(k1, (N, C), dtype=jnp.float32)
    targets = jax.random.randint(k2, (N,), 0, C, dtype=jnp.int32)
    loss = cross_entropy_loss(preds, targets)
    jax.block_until_ready(loss)
    ref = _reference(preds, targets)
    assert jnp.allclose(loss, ref, rtol=1e-5, atol=1e-5), (loss, ref)

    # Case 2: exercise row padding + class-axis streaming (online logsumexp)
    # and the ragged last class tile (masked path) at small shapes.
    k3, k4 = jax.random.split(k2)
    N2, C2 = 10, 160
    preds2 = jax.random.normal(k3, (N2, C2), dtype=jnp.float32)
    targets2 = jax.random.randint(k4, (N2,), 0, C2, dtype=jnp.int32)
    loss2 = cross_entropy_loss(preds2, targets2, row_tile=8, class_tile=128)
    jax.block_until_ready(loss2)
    ref2 = _reference(preds2, targets2)
    assert jnp.allclose(loss2, ref2, rtol=1e-5, atol=1e-5), (loss2, ref2)

    # Case 3: bf16 inputs -> native-dtype compare/max/select path, ragged tile,
    # two row tiles with row padding.
    k5, k6 = jax.random.split(k4)
    N3, C3 = 24, 200
    preds3 = jax.random.normal(k5, (N3, C3), dtype=jnp.bfloat16)
    targets3 = jax.random.randint(k6, (N3,), 0, C3, dtype=jnp.int32)
    loss3 = cross_entropy_loss(preds3, targets3, class_tile=128)
    jax.block_until_ready(loss3)
    ref3 = _reference(preds3, targets3)
    assert jnp.allclose(loss3, ref3, rtol=1e-4, atol=1e-4), (loss3, ref3)

    print("KERNEL_OK")
</pallas_src>

<mosaic_0001>
module attributes {stable_mosaic.version = 11 : i64} {
  func.func @_ce_kernel(%arg0: i32, %arg1: i32, %arg2: memref<8x32xf32, #tpu.memory_space<vmem>>, %arg3: memref<8x1xi32, #tpu.memory_space<vmem>>, %arg4: memref<8x1xf32, #tpu.memory_space<vmem>>, %arg5: memref<8x1xf32, #tpu.memory_space<vmem>>, %arg6: memref<8x1xf32, #tpu.memory_space<vmem>>, %arg7: memref<8x1xf32, #tpu.memory_space<vmem>>) attributes {dimension_semantics = [#tpu.dimension_semantics<parallel>, #tpu.dimension_semantics<arbitrary>], iteration_bounds = array<i64: 1, 1>, scalar_prefetch = 0 : i64, scratch_operands = 3 : i64, tpu.core_type = #tpu.core_type<tc>, window_params = [{transform_indices = @transform_0, window_bounds = array<i64: 8, 32>}, {transform_indices = @transform_1, window_bounds = array<i64: 8, 1>}, {transform_indices = @transform_2, window_bounds = array<i64: 8, 1>}]} {
    %c0_i32 = arith.constant 0 : i32
    %0 = arith.cmpi eq, %arg1, %c0_i32 : i32
    %1 = arith.extui %0 : i1 to i32
    %c0_i32_0 = arith.constant 0 : i32
    %2 = arith.cmpi ne, %1, %c0_i32_0 : i32
    scf.if %2 {
      %cst_23 = arith.constant 0xFF800000 : f32
      %38 = vector.broadcast %cst_23 : f32 to vector<8x1xf32>
      %c0_24 = arith.constant 0 : index
      %c0_25 = arith.constant 0 : index
      %39 = vector.load %arg5[%c0_24, %c0_25] : memref<8x1xf32, #tpu.memory_space<vmem>>, vector<8x1xf32>
      tpu.vector_store %arg5[%c0_24, %c0_25], %38 {strides = array<i32>} : memref<8x1xf32, #tpu.memory_space<vmem>>, vector<8x1xf32>,
      %cst_26 = arith.constant 0.000000e+00 : f32
      %40 = vector.broadcast %cst_26 : f32 to vector<8x1xf32>
      %c0_27 = arith.constant 0 : index
      %c0_28 = arith.constant 0 : index
      %41 = vector.load %arg6[%c0_27, %c0_28] : memref<8x1xf32, #tpu.memory_space<vmem>>, vector<8x1xf32>
      tpu.vector_store %arg6[%c0_27, %c0_28], %40 {strides = array<i32>} : memref<8x1xf32, #tpu.memory_space<vmem>>, vector<8x1xf32>,
      %cst_29 = arith.constant 0.000000e+00 : f32
      %42 = vector.broadcast %cst_29 : f32 to vector<8x1xf32>
      %c0_30 = arith.constant 0 : index
      %c0_31 = arith.constant 0 : index
      %43 = vector.load %arg7[%c0_30, %c0_31] : memref<8x1xf32, #tpu.memory_space<vmem>>, vector<8x1xf32>
      tpu.vector_store %arg7[%c0_30, %c0_31], %42 {strides = array<i32>} : memref<8x1xf32, #tpu.memory_space<vmem>>, vector<8x1xf32>,
    } else {
    }
    %c0 = arith.constant 0 : index
    %c0_1 = arith.constant 0 : index
    %3 = vector.load %arg2[%c0, %c0_1] : memref<8x32xf32, #tpu.memory_space<vmem>>, vector<8x32xf32>
    %4 = tpu.iota {dimensions = array<i32: 1>} : vector<8x32xi32>
    %c0_2 = arith.constant 0 : index
    %c0_3 = arith.constant 0 : index
    %5 = vector.load %arg3[%c0_2, %c0_3] : memref<8x1xi32, #tpu.memory_space<vmem>>, vector<8x1xi32>
    %c32_i32 = arith.constant 32 : i32
    %6 = arith.muli %arg1, %c32_i32 : i32
    %7 = vector.broadcast %6 : i32 to vector<8x1xi32>
    %8 = arith.subi %5, %7 : vector<8x1xi32>
    %9 = vector.broadcast %8 : vector<8x1xi32> to vector<8x32xi32>
    %10 = arith.cmpi eq, %4, %9 : vector<8x32xi32>
    %cst = arith.constant 0.000000e+00 : f32
    %11 = vector.broadcast %cst : f32 to vector<8x32xf32>
    %12 = arith.select %10, %3, %11 : vector<8x32xi1>, vector<8x32xf32>
    %cst_4 = arith.constant dense<0.000000e+00> : vector<8xf32>
    %13 = vector.multi_reduction <add>, %12, %cst_4 [1] : vector<8x32xf32> to vector<8xf32>
    %14 = vector.shape_cast %13 : vector<8xf32> to vector<8x1xf32>
    %c0_5 = arith.constant 0 : index
    %c0_6 = arith.constant 0 : index
    %15 = vector.load %arg7[%c0_5, %c0_6] : memref<8x1xf32, #tpu.memory_space<vmem>>, vector<8x1xf32>
    %16 = arith.addf %15, %14 : vector<8x1xf32>
    %c0_7 = arith.constant 0 : index
    %c0_8 = arith.constant 0 : index
    %17 = vector.load %arg7[%c0_7, %c0_8] : memref<8x1xf32, #tpu.memory_space<vmem>>, vector<8x1xf32>
    tpu.vector_store %arg7[%c0_7, %c0_8], %16 {strides = array<i32>} : memref<8x1xf32, #tpu.memory_space<vmem>>, vector<8x1xf32>,
    %cst_9 = arith.constant dense<0xFF800000> : vector<8xf32>
    %18 = vector.multi_reduction <maximumf>, %3, %cst_9 [1] : vector<8x32xf32> to vector<8xf32>
    %19 = vector.shape_cast %18 : vector<8xf32> to vector<8x1xf32>
    %c0_10 = arith.constant 0 : index
    %c0_11 = arith.constant 0 : index
    %20 = vector.load %arg5[%c0_10, %c0_11] : memref<8x1xf32, #tpu.memory_space<vmem>>, vector<8x1xf32>
    %21 = arith.maximumf %20, %19 : vector<8x1xf32>
    %22 = vector.broadcast %21 : vector<8x1xf32> to vector<8x32xf32>
    %23 = arith.subf %3, %22 : vector<8x32xf32>
    %24 = math.exp %23 : vector<8x32xf32>
    %c0_12 = arith.constant 0 : index
    %c0_13 = arith.constant 0 : index
    %25 = vector.load %arg6[%c0_12, %c0_13] : memref<8x1xf32, #tpu.memory_space<vmem>>, vector<8x1xf32>
    %c0_14 = arith.constant 0 : index
    %c0_15 = arith.constant 0 : index
    %26 = vector.load %arg5[%c0_14, %c0_15] : memref<8x1xf32, #tpu.memory_space<vmem>>, vector<8x1xf32>
    %27 = arith.subf %26, %21 : vector<8x1xf32>
    %28 = math.exp %27 : vector<8x1xf32>
    %29 = arith.mulf %25, %28 : vector<8x1xf32>
    %cst_16 = arith.constant dense<0.000000e+00> : vector<8xf32>
    %30 = vector.multi_reduction <add>, %24, %cst_16 [1] : vector<8x32xf32> to vector<8xf32>
    %31 = vector.shape_cast %30 : vector<8xf32> to vector<8x1xf32>
    %32 = arith.addf %29, %31 : vector<8x1xf32>
    %c0_17 = arith.constant 0 : index
    %c0_18 = arith.constant 0 : index
    %33 = vector.load %arg6[%c0_17, %c0_18] : memref<8x1xf32, #tpu.memory_space<vmem>>, vector<8x1xf32>
    tpu.vector_store %arg6[%c0_17, %c0_18], %32 {strides = array<i32>} : memref<8x1xf32, #tpu.memory_space<vmem>>, vector<8x1xf32>,
    %c0_19 = arith.constant 0 : index
    %c0_20 = arith.constant 0 : index
    %34 = vector.load %arg5[%c0_19, %c0_20] : memref<8x1xf32, #tpu.memory_space<vmem>>, vector<8x1xf32>
    tpu.vector_store %arg5[%c0_19, %c0_20], %21 {strides = array<i32>} : memref<8x1xf32, #tpu.memory_space<vmem>>, vector<8x1xf32>,
    %c0_i32_21 = arith.constant 0 : i32
    %35 = arith.cmpi eq, %arg1, %c0_i32_21 : i32
    %36 = arith.extui %35 : i1 to i32
    %c0_i32_22 = arith.constant 0 : i32
    %37 = arith.cmpi ne, %36, %c0_i32_22 : i32
    scf.if %37 {
      %38 = tpu.iota {dimensions = array<i32: 0>} : vector<8x1xi32>
      %c8_i32 = arith.constant 8 : i32
      %39 = arith.muli %arg0, %c8_i32 : i32
      %40 = vector.broadcast %39 : i32 to vector<8x1xi32>
      %41 = arith.addi %38, %40 : vector<8x1xi32>
      %c8_i32_23 = arith.constant 8 : i32
      %42 = vector.broadcast %c8_i32_23 : i32 to vector<8x1xi32>
      %43 = arith.cmpi slt, %41, %42 : vector<8x1xi32>
      %c0_24 = arith.constant 0 : index
      %c0_25 = arith.constant 0 : index
      %44 = vector.load %arg5[%c0_24, %c0_25] : memref<8x1xf32, #tpu.memory_space<vmem>>, vector<8x1xf32>
      %c0_26 = arith.constant 0 : index
      %c0_27 = arith.constant 0 : index
      %45 = vector.load %arg6[%c0_26, %c0_27] : memref<8x1xf32, #tpu.memory_space<vmem>>, vector<8x1xf32>
      %46 = math.log %45 : vector<8x1xf32>
      %47 = arith.addf %44, %46 : vector<8x1xf32>
      %c0_28 = arith.constant 0 : index
      %c0_29 = arith.constant 0 : index
      %48 = vector.load %arg7[%c0_28, %c0_29] : memref<8x1xf32, #tpu.memory_space<vmem>>, vector<8x1xf32>
      %49 = arith.subf %47, %48 : vector<8x1xf32>
      %cst_30 = arith.constant 0.000000e+00 : f32
      %50 = vector.broadcast %cst_30 : f32 to vector<8x1xf32>
      %51 = arith.select %43, %49, %50 : vector<8x1xi1>, vector<8x1xf32>
      %c0_31 = arith.constant 0 : index
      %c0_32 = arith.constant 0 : index
      %52 = vector.load %arg4[%c0_31, %c0_32] : memref<8x1xf32, #tpu.memory_space<vmem>>, vector<8x1xf32>
      tpu.vector_store %arg4[%c0_31, %c0_32], %51 {strides = array<i32>} : memref<8x1xf32, #tpu.memory_space<vmem>>, vector<8x1xf32>,
    } else {
    }
    return
  }
  func.func @transform_0(%arg0: i32, %arg1: i32) -> (i32, i32) {
    %c0_i32 = arith.constant 0 : i32
    return %arg0, %arg1 : i32, i32
  }
  func.func @transform_1(%arg0: i32, %arg1: i32) -> (i32, i32) {
    %c0_i32 = arith.constant 0 : i32
    %c0_i32_0 = arith.constant 0 : i32
    return %arg0, %c0_i32 : i32, i32
  }
  func.func @transform_2(%arg0: i32, %arg1: i32) -> (i32, i32) {
    %c0_i32 = arith.constant 0 : i32
    %c0_i32_0 = arith.constant 0 : i32
    return %arg0, %c0_i32 : i32, i32
  }
}

</mosaic_0001>

<llo_original>
// kernel: tpu_custom_call.1
$region0: #{tpu_custom_call.1}
  #allocation0 [shape = 'u32[]', space=smem, size = 0x4, offset = 0x4, fixed_abs, tag = 'smem constant byte address 0x4 - core index']
  #allocation1 [shape = 'u32[144,128]{1,0:T(1,128)}', space=vmem, size = 0x12000, scoped, tag = 'internal scratch']
  #allocation2 [shape = 'f32[8,1]{1,0:T(8,128)}', space=vmem, size = 0x1000, scoped, tag = 'scratch operand']
  #allocation3 [shape = 'f32[8,1]{1,0:T(8,128)}', space=vmem, size = 0x1000, scoped, tag = 'scratch operand']
  #allocation4 [shape = 'f32[8,1]{1,0:T(8,128)}', space=vmem, size = 0x1000, scoped, tag = 'scratch operand']
  %s0 = inlined_call_operand.vmem [shape: f32[8,32], index: 0, kind: input, shape index: {}]
  %s1 = inlined_call_operand.vmem [shape: s32[8,1], index: 1, kind: input, shape index: {}]
  %s2 = inlined_call_operand.vmem [shape: f32[8,1], index: 2, kind: output, shape index: {}]
  %s3 = sld [smem:[#allocation0]]
  $region26: #{tpu_custom_call.1} parent=0
    _
  %s5 = ssub.s32 1, %s3
  %s6 = scalar_select 0, %s5, %s3
  // Predicated region
  $region2: #{tpu_custom_call.1} parent=0 // pred_check
    _
  $region3: #{tpu_custom_call.1} parent=0 // pred_check_branch
    %8 = sbr.rel (0) target = $region5
  $region4: #{tpu_custom_call.1} parent=0 // pred_region
    _
  $region5: #{tpu_custom_call.1} parent=0 // pred_fallthru
    _
  // Predicated region
  $region6: #{tpu_custom_call.1} parent=0 // pred_check
    _
  $region7: #{tpu_custom_call.1} parent=0 // pred_check_branch
    %10 = sbr.rel (0) target = $region9
  $region8: #{tpu_custom_call.1} parent=0 // pred_region
    _
  $region9: #{tpu_custom_call.1} parent=0 // pred_fallthru
    _
  %p11 = scmp.eq.s32.totalorder 0, 0
  // Predicated region
  $region10: #{tpu_custom_call.1} parent=0 // pred_check
    %p12 = pneg %p11
  $region11: #{tpu_custom_call.1} parent=0 // pred_check_branch
    %14 = sbr.rel (%p12) target = $region13
  $region12: #{tpu_custom_call.1} parent=0 // pred_region
    %vm15 = vcmask 7168
    %16 = vst.msk [vmem:[#allocation2] sm:$0xff] %vm15, -inf
    %17 = vst.msk [vmem:[#allocation3] sm:$0xff] %vm15, 0.0
    %18 = vst.msk [vmem:[#allocation4] sm:$0xff] %vm15, 0.0
  $region13: #{tpu_custom_call.1} parent=0 // pred_fallthru
    _
  %v19 = vld [vmem:[%s0] sm:$0xff]
  %v20 = vlaneseq
  %v21 = vand.u32 %v20, 127
  %v22 = vld [vmem:[%s1] sm:$0xff]
  %s23 = smul.u32 0, 32
  %v24 = vstv %s23
  %v25 = vsub.s32 %v22, %v24
  %26 = vset.pattern.permute.xlu0 0
  %27 = vperm.xlu0 %26, %v25
  %v28 = vpop.permute.xlu0 %27
  %vm29 = vcmp.eq.s32.totalorder %v21, %v28
  %v30 = vsel %vm29, %v19, 0.0
  %vm31 = vcmask 261120
  %v32 = vsel %vm31, %v30, 0.0
  %33 = vadd.xlane.f32.xlu0 %v32
  %v34 = vpop.xlane.xlu0 %33
  %v35 = vld [vmem:[#allocation4] sm:$0xff]
  %v36 = vadd.f32 %v35, %v34
  %vm37 = vcmask 7168
  %38 = vst.msk [vmem:[#allocation4] sm:$0xff] %vm37, %v36
  %v39 = vsel %vm31, %v19, -inf
  %40 = vmax.xlane.f32.xlu0 %v39
  %v41 = vpop.xlane.xlu0 %40
  %v42 = vld [vmem:[#allocation2] sm:$0xff]
  %v43 = vmax.f32 %v42, %v41
  %45 = vset.pattern.permute.xlu0 0
  %46 = vperm.xlu0 %45, %v43
  %v47 = vpop.permute.xlu0 %46
  %v49 = vsub.f32 %v19, %v47
  %v50 = vmul.f32 %v49, 1.442695
  %v51 = vpow.pop %v50
  %v52 = vld [vmem:[#allocation3] sm:$0xff]
  %v53 = vsub.f32 %v42, %v43
  %v54 = vmul.f32 %v53, 1.442695
  %v55 = vpow.pop %v54
  %v56 = vmul.f32 %v52, %v55
  %v57 = vsel %vm31, %v51, 0.0
  %58 = vadd.xlane.f32.xlu0 %v57
  %v59 = vpop.xlane.xlu0 %58
  %v60 = vadd.f32 %v56, %v59
  %61 = vst.msk [vmem:[#allocation3] sm:$0xff] %vm37, %v60
  %62 = vst.msk [vmem:[#allocation2] sm:$0xff] %vm37, %v43
  // Predicated region
  $region14: #{tpu_custom_call.1} parent=0 // pred_check
    %p63 = pneg %p11
  $region15: #{tpu_custom_call.1} parent=0 // pred_check_branch
    %65 = sbr.rel (%p63) target = $region17
  $region16: #{tpu_custom_call.1} parent=0 // pred_region
    %v66 = vlaneseq
    %v67 = vshrl.u32 %v66, 7
    %s68 = smul.u32 0, 8
    %v69 = vstv %s68
    %v70 = vadd.s32 %v67, %v69
    %vm71 = vcmp.lt.s32.totalorder %v70, 8
    %v72 = vld [vmem:[#allocation2] sm:$0xff]
    %v73 = vld [vmem:[#allocation3] sm:$0xff]
    %v74 = vlog2.pop %v73
    %v75 = vmul.f32 %v74, 0.6931472
    %v76 = vadd.f32 %v72, %v75
    %v77 = vld [vmem:[#allocation4] sm:$0xff]
    %v78 = vsub.f32 %v76, %v77
    %v79 = vsel %vm71, %v78, 0.0
    %80 = vst.msk [vmem:[%s2] sm:$0xff] %vm37, %v79
  $region17: #{tpu_custom_call.1} parent=0 // pred_fallthru
    _
  // Predicated region
  $region18: #{tpu_custom_call.1} parent=0 // pred_check
    _
  $region19: #{tpu_custom_call.1} parent=0 // pred_check_branch
    %82 = sbr.rel (0) target = $region21
  $region20: #{tpu_custom_call.1} parent=0 // pred_region
    _
  $region21: #{tpu_custom_call.1} parent=0 // pred_fallthru
    _
  // Predicated region
  $region22: #{tpu_custom_call.1} parent=0 // pred_check
    _
  $region23: #{tpu_custom_call.1} parent=0 // pred_check_branch
    %84 = sbr.rel (0) target = $region25
  $region24: #{tpu_custom_call.1} parent=0 // pred_region
    _
  $region25: #{tpu_custom_call.1} parent=0 // pred_fallthru
    _

</llo_original>
